<compile_context>
chip_gen: v7x
topology: tpu7x:2x2x1
jax: 0.10.0
libtpu: 0.0.40
codegen_flags: <defaults>
</compile_context>

<pallas_src>
import jax
import jax.numpy as jnp
from jax.experimental import pallas as pl
from jax.experimental.pallas import tpu as pltpu


def _scores_kernel(x_ref, scores_ref):
    # x_ref: (1, TILE_N, K) VMEM tile for one (batch, N-tile) grid point.
    x = x_ref[...]
    box_scores = x[:, :, 4:5]          # (1, TILE_N, 1)
    class_scores = x[:, :, 5:]         # (1, TILE_N, C)  (slice before transpose)
    scores = jnp.sqrt(box_scores * class_scores)          # (1, TILE_N, C)
    # Transpose to (1, C, TILE_N): XLU work, hidden under the HBM-bound DMA.
    # Output tile is lane-dense along N (TILE_N is a multiple of 128).
    scores_ref[...] = jnp.transpose(scores, (0, 2, 1))


def _round_up(v, m):
    return (v + m - 1) // m * m


def boxes_scores(x, *, tile_n=512):
    """x: [B, N, 5 + C] -> (boxes [B, N, 4], scores [B, C, N])."""
    B, N, K = x.shape
    assert K > 5, "last dim must be 4 box coords + 1 obj score + >=1 class score"
    C = K - 5

    # boxes: plain XLA slice in the wrapper (pure data movement at HBM BW);
    # keeping it out of the kernel avoids a narrow 4-lane output block.
    boxes = x[..., :4]

    # Choose a 128-aligned N tile; don't exceed (padded) N for small inputs.
    tile_n = min(_round_up(tile_n, 128), _round_up(N, 128))
    n_pad = _round_up(N, tile_n)
    x_p = x if n_pad == N else jnp.pad(x, ((0, 0), (0, n_pad - N), (0, 0)))
    n_tiles = n_pad // tile_n

    scores_p = pl.pallas_call(
        _scores_kernel,
        out_shape=jax.ShapeDtypeStruct((B, C, n_pad), x.dtype),
        grid=(B, n_tiles),
        in_specs=[
            # (1, TILE_N, K): last dim K equals the full array dim, TILE_N is
            # 128-aligned.  TODO(synk): sweep pipeline_mode=pl.Buffered(3) —
            # per-tile compute is tiny so a third buffer may hide DMA latency.
            pl.BlockSpec((1, tile_n, K), lambda b, n: (b, n, 0)),
        ],
        # Lane-dense scores tile: (1, C, TILE_N), N (128-aligned) on lanes.
        out_specs=pl.BlockSpec((1, C, tile_n), lambda b, n: (b, 0, n)),
        compiler_params=pltpu.CompilerParams(
            dimension_semantics=("parallel", "parallel"),
        ),
    )(x_p)

    scores = scores_p if n_pad == N else scores_p[:, :, :N]
    return boxes, scores


def _reference(x):
    boxes = x[..., :4]
    box_scores = x[..., 4:5]
    class_scores = x[..., 5:]
    scores = jnp.sqrt(box_scores * class_scores)
    scores = jnp.transpose(scores, (0, 2, 1))
    return boxes, scores


if __name__ == "__main__":
    # Small shapes consistent with the module: batch=2, 256 predictions,
    # 8 classes -> last dim = 5 + 8 = 13.
    B, N, C = 2, 256, 8
    key = jax.random.PRNGKey(0)
    # Non-negative scores (post-sigmoid YOLO outputs) so sqrt is well-defined.
    x = jax.random.uniform(key, (B, N, 5 + C), dtype=jnp.float32)

    boxes, scores = boxes_scores(x)
    jax.block_until_ready((boxes, scores))

    ref_boxes, ref_scores = _reference(x)
    assert boxes.shape == (B, N, 4)
    assert scores.shape == (B, C, N)
    assert jnp.allclose(boxes, ref_boxes, atol=1e-6, rtol=1e-6)
    assert jnp.allclose(scores, ref_scores, atol=1e-5, rtol=1e-5)

    print("KERNEL_OK")
</pallas_src>

<mosaic_0001>
module attributes {stable_mosaic.version = 11 : i64} {
  func.func @_scores_kernel(%arg0: i32, %arg1: i32, %arg2: memref<1x256x13xf32, #tpu.memory_space<vmem>>, %arg3: memref<1x8x256xf32, #tpu.memory_space<vmem>>) attributes {dimension_semantics = [#tpu.dimension_semantics<parallel>, #tpu.dimension_semantics<parallel>], iteration_bounds = array<i64: 2, 1>, scalar_prefetch = 0 : i64, scratch_operands = 0 : i64, tpu.core_type = #tpu.core_type<tc>, window_params = [{transform_indices = @transform_0, window_bounds = array<i64: 1, 256, 13>}, {transform_indices = @transform_1, window_bounds = array<i64: 1, 8, 256>}]} {
    %c0 = arith.constant 0 : index
    %c0_0 = arith.constant 0 : index
    %c0_1 = arith.constant 0 : index
    %0 = vector.load %arg2[%c0, %c0_0, %c0_1] : memref<1x256x13xf32, #tpu.memory_space<vmem>>, vector<1x256x13xf32>
    %1 = vector.extract_strided_slice %0 {offsets = [0, 0, 4], sizes = [1, 256, 1], strides = [1, 1, 1]} : vector<1x256x13xf32> to vector<1x256x1xf32>
    %2 = vector.extract_strided_slice %0 {offsets = [0, 0, 5], sizes = [1, 256, 8], strides = [1, 1, 1]} : vector<1x256x13xf32> to vector<1x256x8xf32>
    %3 = vector.broadcast %1 : vector<1x256x1xf32> to vector<1x256x8xf32>
    %4 = arith.mulf %3, %2 : vector<1x256x8xf32>
    %5 = math.sqrt %4 : vector<1x256x8xf32>
    %6 = tpu.transpose %5, [0, 2, 1] : vector<1x256x8xf32> -> vector<1x8x256xf32>
    %c0_2 = arith.constant 0 : index
    %c0_3 = arith.constant 0 : index
    %c0_4 = arith.constant 0 : index
    %7 = vector.load %arg3[%c0_2, %c0_3, %c0_4] : memref<1x8x256xf32, #tpu.memory_space<vmem>>, vector<1x8x256xf32>
    tpu.vector_store %arg3[%c0_2, %c0_3, %c0_4], %6 {strides = array<i32>} : memref<1x8x256xf32, #tpu.memory_space<vmem>>, vector<1x8x256xf32>,
    return
  }
  func.func @transform_0(%arg0: i32, %arg1: i32) -> (i32, i32, i32) {
    %c0_i32 = arith.constant 0 : i32
    %c0_i32_0 = arith.constant 0 : i32
    return %arg0, %arg1, %c0_i32 : i32, i32, i32
  }
  func.func @transform_1(%arg0: i32, %arg1: i32) -> (i32, i32, i32) {
    %c0_i32 = arith.constant 0 : i32
    %c0_i32_0 = arith.constant 0 : i32
    return %arg0, %c0_i32, %arg1 : i32, i32, i32
  }
}

</mosaic_0001>

<llo_original>
// kernel: tpu_custom_call.1
$region0: #{tpu_custom_call.1}
  #allocation0 [shape = 'u32[]', space=smem, size = 0x4, offset = 0x4, fixed_abs, tag = 'smem constant byte address 0x4 - core index']
  #allocation1 [shape = 'u32[144,128]{1,0:T(1,128)}', space=vmem, size = 0x12000, scoped, tag = 'internal scratch']
  %s0 = inlined_call_operand.vmem [shape: f32[2,256,13], index: 0, kind: input, shape index: {}]
  %s1 = inlined_call_operand.hbm [shape: f32[2,8,256], index: 1, kind: output, shape index: {}]
  %s2 = sld [smem:[#allocation0]]
  $region37: #{tpu_custom_call.1} parent=0
    _
  %s4 = ssub.s32 1, %s2
  %s5 = scalar_select 0, %s4, %s2
  $region1: #{tpu_custom_call.1} parent=0
    #allocation2 [shape = 'u8[16384]{0}', space=vmem, size = 0x4000, scoped, tag = 'output window, operand 0']
    #allocation3 [shape = 's32[2]{0}', space=sflag, size = 0x8, scoped, tag = 'scoped memory for tpu_custom_call.1']
    %6 = vsyncpa [#allocation3], 0
    %s7 = scalar_lea.sflag [#allocation3], 1
    %8 = vsyncpa %s7, 0
    loop: start=0, step=1, limit=4
    $region2: #{tpu_custom_call.1} parent=1 // loop_pre_header
      _
    $region3: #{tpu_custom_call.1} parent=1 // loop_header
      %s10 = sphi 0, %s14
      %p11 = scmp.ge.s32.totalorder %s10, 4
      %s17 = sphi 0, %s29
      %s18 = sphi 0, %s25
      %s19 = sphi 0, %s17
      %s20 = sphi 0, %s18
      %s21 = sphi 0, %s19
      %s22 = sphi 0, %s20
      %s34 = sphi 0, %s36
      %s37 = sphi 0, %s34
      %s38 = sphi 0, %s37
      %s54 = sphi 0, %s38
      %s62 = sphi 0, %s64
      %s65 = sphi 0, %s62
      %s66 = sphi 0, %s65
      %s82 = sphi 0, %s66
    $region4: #{tpu_custom_call.1} parent=1 // loop_header_branch
      %13 = sbr.rel (%p11) target = $region8
    $region5: #{tpu_custom_call.1} parent=1 // loop_body
      %s15 = ssub.s32 %s10, 1
      %s16 = ssub.s32 %s10, 2
      %s23 = sadd.s32 1, %s18
      %p24 = scmp.ge.s32.totalorder %s23, 1
      %s25 = scalar_select %p24, 0, %s23
      %s26 = sadd.s32 1, %s17
      %s27 = scalar_select %p24, %s26, %s17
      %p28 = scmp.ge.s32.totalorder %s27, 2
      %s29 = scalar_select %p28, 0, %s27
      %s30 = ssub.s32 %s17, %s29
      %s31 = ssub.s32 %s18, %s25
      %s32 = sor.u32 %s30, %s31
      %p33 = scmp.eq.s32.totalorder %s32, 0
      %s35 = sadd.s32 %s34, 1
      %s36 = scalar_select %p33, %s34, %s35
      %p39 = pneg %p33
      %p40 = scmp.eq.s32.totalorder %s10, 1
      %p41 = por %p39, %p40
      %p42 = scmp.ne.s32.totalorder %s34, %s37
      %p43 = scmp.eq.s32.totalorder %s10, 0
      %p44 = por %p42, %p43
      %p45 = scmp.ne.s32.totalorder %s34, %s37
      %p46 = scmp.eq.s32.totalorder %s15, 1
      %p47 = por %p45, %p46
      %p48 = scmp.ne.s32.totalorder %s37, %s38
      %p49 = scmp.eq.s32.totalorder %s15, 0
      %p50 = por %p48, %p49
      %p51 = scmp.ne.s32.totalorder %s37, %s38
      %p52 = scmp.eq.s32.totalorder %s16, 1
      %p53 = por %p51, %p52
      %p55 = scmp.ne.s32.totalorder %s38, %s54
      %p56 = scmp.eq.s32.totalorder %s16, 0
      %p57 = por %p55, %p56
      %s58 = ssub.s32 %s17, %s29
      %s59 = ssub.s32 %s18, %s25
      %s60 = sor.u32 %s58, %s59
      %p61 = scmp.eq.s32.totalorder %s60, 0
      %s63 = sadd.s32 %s62, 1
      %s64 = scalar_select %p61, %s62, %s63
      %p67 = pneg %p61
      %p68 = scmp.eq.s32.totalorder %s10, 1
      %p69 = por %p67, %p68
      %p70 = scmp.ne.s32.totalorder %s62, %s65
      %p71 = scmp.eq.s32.totalorder %s10, 0
      %p72 = por %p70, %p71
      %p73 = scmp.ne.s32.totalorder %s62, %s65
      %p74 = scmp.eq.s32.totalorder %s15, 1
      %p75 = por %p73, %p74
      %p76 = scmp.ne.s32.totalorder %s65, %s66
      %p77 = scmp.eq.s32.totalorder %s15, 0
      %p78 = por %p76, %p77
      %p79 = scmp.ne.s32.totalorder %s65, %s66
      %p80 = scmp.eq.s32.totalorder %s16, 1
      %p81 = por %p79, %p80
      %p83 = scmp.ne.s32.totalorder %s66, %s82
      %p84 = scmp.eq.s32.totalorder %s16, 0
      %p85 = por %p83, %p84
      %p86 = scmp.le.s32.totalorder 1, %s10
      %p87 = scmp.lt.s32.totalorder %s10, 3
      %p88 = pnand %p86, %p87
      %p89 = pneg %p88
      // Predicated region
      $region9: #{tpu_custom_call.1} parent=5 // pred_check
        _
      $region10: #{tpu_custom_call.1} parent=5 // pred_check_branch
        %91 = sbr.rel (%p88) target = $region12
      $region11: #{tpu_custom_call.1} parent=5 // pred_region
        %s92 = ssub.s32 %s10, 1
      $region12: #{tpu_custom_call.1} parent=5 // pred_fallthru
        _
      %p93 = scmp.lt.s32.totalorder %s10, 2
      // Predicated region
      $region13: #{tpu_custom_call.1} parent=5 // pred_check
        %p94 = pneg %p93
      $region14: #{tpu_custom_call.1} parent=5 // pred_check_branch
        %96 = sbr.rel (%p94) target = $region16
      $region15: #{tpu_custom_call.1} parent=5 // pred_region
        // Predicated region
        $region17: #{tpu_custom_call.1} parent=15 // pred_check
          %p97 = pneg %p44
        $region18: #{tpu_custom_call.1} parent=15 // pred_check_branch
          %99 = sbr.rel (%p97) target = $region20
        $region19: #{tpu_custom_call.1} parent=15 // pred_region
          %s100 = smul.u32 32, %s18
          %p101 = scmp.lt.s32.totalorder %s17, 1
          %s102 = scalar_select %p101, %s17, 1
          %p103 = scmp.lt.s32.totalorder %s100, 31
          %s104 = scalar_select %p103, %s100, 31
          %s105 = smul.addr %s102, 32
          %s106 = sadd.s32 %s104, %s105
          %s107 = smul.addr %s106, 8
          %s108 = scalar_lea.vmem %s0, %s107
          %s109 = smul.u32 32, %s18
        $region20: #{tpu_custom_call.1} parent=15 // pred_fallthru
          _
      $region16: #{tpu_custom_call.1} parent=5 // pred_fallthru
        _
      %p110 = scmp.le.s32.totalorder 1, %s10
      %p111 = scmp.lt.s32.totalorder %s10, 3
      %p112 = pnand %p110, %p111
      %p113 = pneg %p112
      // Predicated region
      $region21: #{tpu_custom_call.1} parent=5 // pred_check
        _
      $region22: #{tpu_custom_call.1} parent=5 // pred_check_branch
        %115 = sbr.rel (%p112) target = $region24
      $region23: #{tpu_custom_call.1} parent=5 // pred_region
        %s116 = ssub.s32 %s10, 1
        %s117 = smul.u32 32, %s20
        %p118 = scmp.lt.s32.totalorder %s19, 1
        %s119 = scalar_select %p118, %s19, 1
        %p120 = scmp.lt.s32.totalorder %s117, 31
        %s121 = scalar_select %p120, %s117, 31
        %s122 = smul.addr %s119, 32
        %s123 = sadd.s32 %s121, %s122
        %s124 = smul.addr %s123, 8
        %s125 = scalar_lea.vmem %s0, %s124
        %p126 = pneg %p50
        %p127 = pneg %p47
        %p128 = pneg %p78
        %p129 = pneg %p75
        %s130 = sand.u32 %s65, 1
        %s131 = scalar_lea.sflag [#allocation3], %s130
        %s132 = sand.u32 %s65, 1
        %s133 = smul.addr %s132, 16
        %s134 = scalar_lea.vmem [#allocation2], %s133
        %s135 = smul.u32 32, %s20
        %p136 = scmp.lt.s32.totalorder %s19, 1
        %s137 = scalar_select %p136, %s19, 1
        %p138 = scmp.lt.s32.totalorder %s135, 31
        %s139 = scalar_select %p138, %s135, 31
        %s140 = smul.addr %s137, 32
        %s141 = sadd.s32 %s139, %s140
        %s142 = smul.addr %s141, 8
        %s143 = scalar_lea.vmem %s0, %s142
        %s144 = smul.u32 32, %s20
        %s145 = smul.u32 2, %s20
        %v146 = vld [vmem:[%s143] sm:$0xff]
        %v147 = vld [vmem:[%s143 + $0x8] sm:$0xff]
        %v148 = vld [vmem:[%s143 + $0x10] sm:$0xff]
        %v149 = vld [vmem:[%s143 + $0x18] sm:$0xff]
        %v150 = vld [vmem:[%s143 + $0x20] sm:$0xff]
        %v151 = vld [vmem:[%s143 + $0x28] sm:$0xff]
        %v152 = vld [vmem:[%s143 + $0x30] sm:$0xff]
        %v153 = vld [vmem:[%s143 + $0x38] sm:$0xff]
        %v154 = vld [vmem:[%s143 + $0x40] sm:$0xff]
        %v155 = vld [vmem:[%s143 + $0x48] sm:$0xff]
        %v156 = vld [vmem:[%s143 + $0x50] sm:$0xff]
        %v157 = vld [vmem:[%s143 + $0x58] sm:$0xff]
        %v158 = vld [vmem:[%s143 + $0x60] sm:$0xff]
        %v159 = vld [vmem:[%s143 + $0x68] sm:$0xff]
        %v160 = vld [vmem:[%s143 + $0x70] sm:$0xff]
        %v161 = vld [vmem:[%s143 + $0x78] sm:$0xff]
        %v162 = vld [vmem:[%s143 + $0x80] sm:$0xff]
        %v163 = vld [vmem:[%s143 + $0x88] sm:$0xff]
        %v164 = vld [vmem:[%s143 + $0x90] sm:$0xff]
        %v165 = vld [vmem:[%s143 + $0x98] sm:$0xff]
        %v166 = vld [vmem:[%s143 + $0xa0] sm:$0xff]
        %v167 = vld [vmem:[%s143 + $0xa8] sm:$0xff]
        %v168 = vld [vmem:[%s143 + $0xb0] sm:$0xff]
        %v169 = vld [vmem:[%s143 + $0xb8] sm:$0xff]
        %v170 = vld [vmem:[%s143 + $0xc0] sm:$0xff]
        %v171 = vld [vmem:[%s143 + $0xc8] sm:$0xff]
        %v172 = vld [vmem:[%s143 + $0xd0] sm:$0xff]
        %v173 = vld [vmem:[%s143 + $0xd8] sm:$0xff]
        %v174 = vld [vmem:[%s143 + $0xe0] sm:$0xff]
        %v175 = vld [vmem:[%s143 + $0xe8] sm:$0xff]
        %v176 = vld [vmem:[%s143 + $0xf0] sm:$0xff]
        %v177 = vld [vmem:[%s143 + $0xf8] sm:$0xff]
        %179 = vset.pattern.permute.xlu0 4
        %180 = vperm.xlu0 %179, %v146
        %v181 = vpop.permute.xlu0 %180
        %184 = vset.pattern.permute.xlu0 4
        %185 = vperm.xlu0 %184, %v147
        %v186 = vpop.permute.xlu0 %185
        %189 = vset.pattern.permute.xlu0 4
        %190 = vperm.xlu0 %189, %v148
        %v191 = vpop.permute.xlu0 %190
        %194 = vset.pattern.permute.xlu0 4
        %195 = vperm.xlu0 %194, %v149
        %v196 = vpop.permute.xlu0 %195
        %199 = vset.pattern.permute.xlu0 4
        %200 = vperm.xlu0 %199, %v150
        %v201 = vpop.permute.xlu0 %200
        %204 = vset.pattern.permute.xlu0 4
        %205 = vperm.xlu0 %204, %v151
        %v206 = vpop.permute.xlu0 %205
        %209 = vset.pattern.permute.xlu0 4
        %210 = vperm.xlu0 %209, %v152
        %v211 = vpop.permute.xlu0 %210
        %214 = vset.pattern.permute.xlu0 4
        %215 = vperm.xlu0 %214, %v153
        %v216 = vpop.permute.xlu0 %215
        %219 = vset.pattern.permute.xlu0 4
        %220 = vperm.xlu0 %219, %v154
        %v221 = vpop.permute.xlu0 %220
        %224 = vset.pattern.permute.xlu0 4
        %225 = vperm.xlu0 %224, %v155
        %v226 = vpop.permute.xlu0 %225
        %229 = vset.pattern.permute.xlu0 4
        %230 = vperm.xlu0 %229, %v156
        %v231 = vpop.permute.xlu0 %230
        %234 = vset.pattern.permute.xlu0 4
        %235 = vperm.xlu0 %234, %v157
        %v236 = vpop.permute.xlu0 %235
        %239 = vset.pattern.permute.xlu0 4
        %240 = vperm.xlu0 %239, %v158
        %v241 = vpop.permute.xlu0 %240
        %244 = vset.pattern.permute.xlu0 4
        %245 = vperm.xlu0 %244, %v159
        %v246 = vpop.permute.xlu0 %245
        %249 = vset.pattern.permute.xlu0 4
        %250 = vperm.xlu0 %249, %v160
        %v251 = vpop.permute.xlu0 %250
        %254 = vset.pattern.permute.xlu0 4
        %255 = vperm.xlu0 %254, %v161
        %v256 = vpop.permute.xlu0 %255
        %259 = vset.pattern.permute.xlu0 4
        %260 = vperm.xlu0 %259, %v162
        %v261 = vpop.permute.xlu0 %260
        %264 = vset.pattern.permute.xlu0 4
        %265 = vperm.xlu0 %264, %v163
        %v266 = vpop.permute.xlu0 %265
        %269 = vset.pattern.permute.xlu0 4
        %270 = vperm.xlu0 %269, %v164
        %v271 = vpop.permute.xlu0 %270
        %274 = vset.pattern.permute.xlu0 4
        %275 = vperm.xlu0 %274, %v165
        %v276 = vpop.permute.xlu0 %275
        %279 = vset.pattern.permute.xlu0 4
        %280 = vperm.xlu0 %279, %v166
        %v281 = vpop.permute.xlu0 %280
        %284 = vset.pattern.permute.xlu0 4
        %285 = vperm.xlu0 %284, %v167
        %v286 = vpop.permute.xlu0 %285
        %289 = vset.pattern.permute.xlu0 4
        %290 = vperm.xlu0 %289, %v168
        %v291 = vpop.permute.xlu0 %290
        %294 = vset.pattern.permute.xlu0 4
        %295 = vperm.xlu0 %294, %v169
        %v296 = vpop.permute.xlu0 %295
        %299 = vset.pattern.permute.xlu0 4
        %300 = vperm.xlu0 %299, %v170
        %v301 = vpop.permute.xlu0 %300
        %304 = vset.pattern.permute.xlu0 4
        %305 = vperm.xlu0 %304, %v171
        %v306 = vpop.permute.xlu0 %305
        %309 = vset.pattern.permute.xlu0 4
        %310 = vperm.xlu0 %309, %v172
        %v311 = vpop.permute.xlu0 %310
        %314 = vset.pattern.permute.xlu0 4
        %315 = vperm.xlu0 %314, %v173
        %v316 = vpop.permute.xlu0 %315
        %319 = vset.pattern.permute.xlu0 4
        %320 = vperm.xlu0 %319, %v174
        %v321 = vpop.permute.xlu0 %320
        %324 = vset.pattern.permute.xlu0 4
        %325 = vperm.xlu0 %324, %v175
        %v326 = vpop.permute.xlu0 %325
        %329 = vset.pattern.permute.xlu0 4
        %330 = vperm.xlu0 %329, %v176
        %v331 = vpop.permute.xlu0 %330
        %334 = vset.pattern.permute.xlu0 4
        %335 = vperm.xlu0 %334, %v177
        %v336 = vpop.permute.xlu0 %335
        %v338 = vmul.f32 %v181, %v146
        %v339 = vmul.f32 %v186, %v147
        %v340 = vmul.f32 %v191, %v148
        %v341 = vmul.f32 %v196, %v149
        %v342 = vmul.f32 %v201, %v150
        %v343 = vmul.f32 %v206, %v151
        %v344 = vmul.f32 %v211, %v152
        %v345 = vmul.f32 %v216, %v153
        %v346 = vmul.f32 %v221, %v154
        %v347 = vmul.f32 %v226, %v155
        %v348 = vmul.f32 %v231, %v156
        %v349 = vmul.f32 %v236, %v157
        %v350 = vmul.f32 %v241, %v158
        %v351 = vmul.f32 %v246, %v159
        %v352 = vmul.f32 %v251, %v160
        %v353 = vmul.f32 %v256, %v161
        %v354 = vmul.f32 %v261, %v162
        %v355 = vmul.f32 %v266, %v163
        %v356 = vmul.f32 %v271, %v164
        %v357 = vmul.f32 %v276, %v165
        %v358 = vmul.f32 %v281, %v166
        %v359 = vmul.f32 %v286, %v167
        %v360 = vmul.f32 %v291, %v168
        %v361 = vmul.f32 %v296, %v169
        %v362 = vmul.f32 %v301, %v170
        %v363 = vmul.f32 %v306, %v171
        %v364 = vmul.f32 %v311, %v172
        %v365 = vmul.f32 %v316, %v173
        %v366 = vmul.f32 %v321, %v174
        %v367 = vmul.f32 %v326, %v175
        %v368 = vmul.f32 %v331, %v176
        %v369 = vmul.f32 %v336, %v177
        %v370 = vrsqrt.pop %v338
        %v371 = vmul.f32 %v338, %v370
        %vm372 = vcmp.eq.f32.partialorder %v338, inf
        %v373 = vsel %vm372, %v338, %v371
        %vm374 = vcmp.eq.f32.partialorder %v338, 0.0
        %v375 = vand.u32 %v338, 2147483648
        %v376 = vsel %vm374, %v375, %v373
        %v377 = vrsqrt.pop %v339
        %v378 = vmul.f32 %v339, %v377
        %vm379 = vcmp.eq.f32.partialorder %v339, inf
        %v380 = vsel %vm379, %v339, %v378
        %vm381 = vcmp.eq.f32.partialorder %v339, 0.0
        %v382 = vand.u32 %v339, 2147483648
        %v383 = vsel %vm381, %v382, %v380
        %v384 = vrsqrt.pop %v340
        %v385 = vmul.f32 %v340, %v384
        %vm386 = vcmp.eq.f32.partialorder %v340, inf
        %v387 = vsel %vm386, %v340, %v385
        %vm388 = vcmp.eq.f32.partialorder %v340, 0.0
        %v389 = vand.u32 %v340, 2147483648
        %v390 = vsel %vm388, %v389, %v387
        %v391 = vrsqrt.pop %v341
        %v392 = vmul.f32 %v341, %v391
        %vm393 = vcmp.eq.f32.partialorder %v341, inf
        %v394 = vsel %vm393, %v341, %v392
        %vm395 = vcmp.eq.f32.partialorder %v341, 0.0
        %v396 = vand.u32 %v341, 2147483648
        %v397 = vsel %vm395, %v396, %v394
        %v398 = vrsqrt.pop %v342
        %v399 = vmul.f32 %v342, %v398
        %vm400 = vcmp.eq.f32.partialorder %v342, inf
        %v401 = vsel %vm400, %v342, %v399
        %vm402 = vcmp.eq.f32.partialorder %v342, 0.0
        %v403 = vand.u32 %v342, 2147483648
        %v404 = vsel %vm402, %v403, %v401
        %v405 = vrsqrt.pop %v343
        %v406 = vmul.f32 %v343, %v405
        %vm407 = vcmp.eq.f32.partialorder %v343, inf
        %v408 = vsel %vm407, %v343, %v406
        %vm409 = vcmp.eq.f32.partialorder %v343, 0.0
        %v410 = vand.u32 %v343, 2147483648
        %v411 = vsel %vm409, %v410, %v408
        %v412 = vrsqrt.pop %v344
        %v413 = vmul.f32 %v344, %v412
        %vm414 = vcmp.eq.f32.partialorder %v344, inf
        %v415 = vsel %vm414, %v344, %v413
        %vm416 = vcmp.eq.f32.partialorder %v344, 0.0
        %v417 = vand.u32 %v344, 2147483648
        %v418 = vsel %vm416, %v417, %v415
        %v419 = vrsqrt.pop %v345
        %v420 = vmul.f32 %v345, %v419
        %vm421 = vcmp.eq.f32.partialorder %v345, inf
        %v422 = vsel %vm421, %v345, %v420
        %vm423 = vcmp.eq.f32.partialorder %v345, 0.0
        %v424 = vand.u32 %v345, 2147483648
        %v425 = vsel %vm423, %v424, %v422
        %v426 = vrsqrt.pop %v346
        %v427 = vmul.f32 %v346, %v426
        %vm428 = vcmp.eq.f32.partialorder %v346, inf
        %v429 = vsel %vm428, %v346, %v427
        %vm430 = vcmp.eq.f32.partialorder %v346, 0.0
        %v431 = vand.u32 %v346, 2147483648
        %v432 = vsel %vm430, %v431, %v429
        %v433 = vrsqrt.pop %v347
        %v434 = vmul.f32 %v347, %v433
        %vm435 = vcmp.eq.f32.partialorder %v347, inf
        %v436 = vsel %vm435, %v347, %v434
        %vm437 = vcmp.eq.f32.partialorder %v347, 0.0
        %v438 = vand.u32 %v347, 2147483648
        %v439 = vsel %vm437, %v438, %v436
        %v440 = vrsqrt.pop %v348
        %v441 = vmul.f32 %v348, %v440
        %vm442 = vcmp.eq.f32.partialorder %v348, inf
        %v443 = vsel %vm442, %v348, %v441
        %vm444 = vcmp.eq.f32.partialorder %v348, 0.0
        %v445 = vand.u32 %v348, 2147483648
        %v446 = vsel %vm444, %v445, %v443
        %v447 = vrsqrt.pop %v349
        %v448 = vmul.f32 %v349, %v447
        %vm449 = vcmp.eq.f32.partialorder %v349, inf
        %v450 = vsel %vm449, %v349, %v448
        %vm451 = vcmp.eq.f32.partialorder %v349, 0.0
        %v452 = vand.u32 %v349, 2147483648
        %v453 = vsel %vm451, %v452, %v450
        %v454 = vrsqrt.pop %v350
        %v455 = vmul.f32 %v350, %v454
        %vm456 = vcmp.eq.f32.partialorder %v350, inf
        %v457 = vsel %vm456, %v350, %v455
        %vm458 = vcmp.eq.f32.partialorder %v350, 0.0
        %v459 = vand.u32 %v350, 2147483648
        %v460 = vsel %vm458, %v459, %v457
        %v461 = vrsqrt.pop %v351
        %v462 = vmul.f32 %v351, %v461
        %vm463 = vcmp.eq.f32.partialorder %v351, inf
        %v464 = vsel %vm463, %v351, %v462
        %vm465 = vcmp.eq.f32.partialorder %v351, 0.0
        %v466 = vand.u32 %v351, 2147483648
        %v467 = vsel %vm465, %v466, %v464
        %v468 = vrsqrt.pop %v352
        %v469 = vmul.f32 %v352, %v468
        %vm470 = vcmp.eq.f32.partialorder %v352, inf
        %v471 = vsel %vm470, %v352, %v469
        %vm472 = vcmp.eq.f32.partialorder %v352, 0.0
        %v473 = vand.u32 %v352, 2147483648
        %v474 = vsel %vm472, %v473, %v471
        %v475 = vrsqrt.pop %v353
        %v476 = vmul.f32 %v353, %v475
        %vm477 = vcmp.eq.f32.partialorder %v353, inf
        %v478 = vsel %vm477, %v353, %v476
        %vm479 = vcmp.eq.f32.partialorder %v353, 0.0
        %v480 = vand.u32 %v353, 2147483648
        %v481 = vsel %vm479, %v480, %v478
        %v482 = vrsqrt.pop %v354
        %v483 = vmul.f32 %v354, %v482
        %vm484 = vcmp.eq.f32.partialorder %v354, inf
        %v485 = vsel %vm484, %v354, %v483
        %vm486 = vcmp.eq.f32.partialorder %v354, 0.0
        %v487 = vand.u32 %v354, 2147483648
        %v488 = vsel %vm486, %v487, %v485
        %v489 = vrsqrt.pop %v355
        %v490 = vmul.f32 %v355, %v489
        %vm491 = vcmp.eq.f32.partialorder %v355, inf
        %v492 = vsel %vm491, %v355, %v490
        %vm493 = vcmp.eq.f32.partialorder %v355, 0.0
        %v494 = vand.u32 %v355, 2147483648
        %v495 = vsel %vm493, %v494, %v492
        %v496 = vrsqrt.pop %v356
        %v497 = vmul.f32 %v356, %v496
        %vm498 = vcmp.eq.f32.partialorder %v356, inf
        %v499 = vsel %vm498, %v356, %v497
        %vm500 = vcmp.eq.f32.partialorder %v356, 0.0
        %v501 = vand.u32 %v356, 2147483648
        %v502 = vsel %vm500, %v501, %v499
        %v503 = vrsqrt.pop %v357
        %v504 = vmul.f32 %v357, %v503
        %vm505 = vcmp.eq.f32.partialorder %v357, inf
        %v506 = vsel %vm505, %v357, %v504
        %vm507 = vcmp.eq.f32.partialorder %v357, 0.0
        %v508 = vand.u32 %v357, 2147483648
        %v509 = vsel %vm507, %v508, %v506
        %v510 = vrsqrt.pop %v358
        %v511 = vmul.f32 %v358, %v510
        %vm512 = vcmp.eq.f32.partialorder %v358, inf
        %v513 = vsel %vm512, %v358, %v511
        %vm514 = vcmp.eq.f32.partialorder %v358, 0.0
        %v515 = vand.u32 %v358, 2147483648
        %v516 = vsel %vm514, %v515, %v513
        %v517 = vrsqrt.pop %v359
        %v518 = vmul.f32 %v359, %v517
        %vm519 = vcmp.eq.f32.partialorder %v359, inf
        %v520 = vsel %vm519, %v359, %v518
        %vm521 = vcmp.eq.f32.partialorder %v359, 0.0
        %v522 = vand.u32 %v359, 2147483648
        %v523 = vsel %vm521, %v522, %v520
        %v524 = vrsqrt.pop %v360
        %v525 = vmul.f32 %v360, %v524
        %vm526 = vcmp.eq.f32.partialorder %v360, inf
        %v527 = vsel %vm526, %v360, %v525
        %vm528 = vcmp.eq.f32.partialorder %v360, 0.0
        %v529 = vand.u32 %v360, 2147483648
        %v530 = vsel %vm528, %v529, %v527
        %v531 = vrsqrt.pop %v361
        %v532 = vmul.f32 %v361, %v531
        %vm533 = vcmp.eq.f32.partialorder %v361, inf
        %v534 = vsel %vm533, %v361, %v532
        %vm535 = vcmp.eq.f32.partialorder %v361, 0.0
        %v536 = vand.u32 %v361, 2147483648
        %v537 = vsel %vm535, %v536, %v534
        %v538 = vrsqrt.pop %v362
        %v539 = vmul.f32 %v362, %v538
        %vm540 = vcmp.eq.f32.partialorder %v362, inf
        %v541 = vsel %vm540, %v362, %v539
        %vm542 = vcmp.eq.f32.partialorder %v362, 0.0
        %v543 = vand.u32 %v362, 2147483648
        %v544 = vsel %vm542, %v543, %v541
        %v545 = vrsqrt.pop %v363
        %v546 = vmul.f32 %v363, %v545
        %vm547 = vcmp.eq.f32.partialorder %v363, inf
        %v548 = vsel %vm547, %v363, %v546
        %vm549 = vcmp.eq.f32.partialorder %v363, 0.0
        %v550 = vand.u32 %v363, 2147483648
        %v551 = vsel %vm549, %v550, %v548
        %v552 = vrsqrt.pop %v364
        %v553 = vmul.f32 %v364, %v552
        %vm554 = vcmp.eq.f32.partialorder %v364, inf
        %v555 = vsel %vm554, %v364, %v553
        %vm556 = vcmp.eq.f32.partialorder %v364, 0.0
        %v557 = vand.u32 %v364, 2147483648
        %v558 = vsel %vm556, %v557, %v555
        %v559 = vrsqrt.pop %v365
        %v560 = vmul.f32 %v365, %v559
        %vm561 = vcmp.eq.f32.partialorder %v365, inf
        %v562 = vsel %vm561, %v365, %v560
        %vm563 = vcmp.eq.f32.partialorder %v365, 0.0
        %v564 = vand.u32 %v365, 2147483648
        %v565 = vsel %vm563, %v564, %v562
        %v566 = vrsqrt.pop %v366
        %v567 = vmul.f32 %v366, %v566
        %vm568 = vcmp.eq.f32.partialorder %v366, inf
        %v569 = vsel %vm568, %v366, %v567
        %vm570 = vcmp.eq.f32.partialorder %v366, 0.0
        %v571 = vand.u32 %v366, 2147483648
        %v572 = vsel %vm570, %v571, %v569
        %v573 = vrsqrt.pop %v367
        %v574 = vmul.f32 %v367, %v573
        %vm575 = vcmp.eq.f32.partialorder %v367, inf
        %v576 = vsel %vm575, %v367, %v574
        %vm577 = vcmp.eq.f32.partialorder %v367, 0.0
        %v578 = vand.u32 %v367, 2147483648
        %v579 = vsel %vm577, %v578, %v576
        %v580 = vrsqrt.pop %v368
        %v581 = vmul.f32 %v368, %v580
        %vm582 = vcmp.eq.f32.partialorder %v368, inf
        %v583 = vsel %vm582, %v368, %v581
        %vm584 = vcmp.eq.f32.partialorder %v368, 0.0
        %v585 = vand.u32 %v368, 2147483648
        %v586 = vsel %vm584, %v585, %v583
        %v587 = vrsqrt.pop %v369
        %v588 = vmul.f32 %v369, %v587
        %vm589 = vcmp.eq.f32.partialorder %v369, inf
        %v590 = vsel %vm589, %v369, %v588
        %vm591 = vcmp.eq.f32.partialorder %v369, 0.0
        %v592 = vand.u32 %v369, 2147483648
        %v593 = vsel %vm591, %v592, %v590
        %626 = vrot.lane.b32.xlu0 %v376, 123
        %v627 = vpop.permute.xlu0 %626
        %628 = vrot.lane.b32.xlu0 %v383, 123
        %v629 = vpop.permute.xlu0 %628
        %630 = vrot.lane.b32.xlu0 %v390, 123
        %v631 = vpop.permute.xlu0 %630
        %632 = vrot.lane.b32.xlu0 %v397, 123
        %v633 = vpop.permute.xlu0 %632
        %634 = vrot.lane.b32.xlu0 %v404, 123
        %v635 = vpop.permute.xlu0 %634
        %636 = vrot.lane.b32.xlu0 %v411, 123
        %v637 = vpop.permute.xlu0 %636
        %638 = vrot.lane.b32.xlu0 %v418, 123
        %v639 = vpop.permute.xlu0 %638
        %640 = vrot.lane.b32.xlu0 %v425, 123
        %v641 = vpop.permute.xlu0 %640
        %642 = vrot.lane.b32.xlu0 %v432, 123
        %v643 = vpop.permute.xlu0 %642
        %644 = vrot.lane.b32.xlu0 %v439, 123
        %v645 = vpop.permute.xlu0 %644
        %646 = vrot.lane.b32.xlu0 %v446, 123
        %v647 = vpop.permute.xlu0 %646
        %648 = vrot.lane.b32.xlu0 %v453, 123
        %v649 = vpop.permute.xlu0 %648
        %650 = vrot.lane.b32.xlu0 %v460, 123
        %v651 = vpop.permute.xlu0 %650
        %652 = vrot.lane.b32.xlu0 %v467, 123
        %v653 = vpop.permute.xlu0 %652
        %654 = vrot.lane.b32.xlu0 %v474, 123
        %v655 = vpop.permute.xlu0 %654
        %656 = vrot.lane.b32.xlu0 %v481, 123
        %v657 = vpop.permute.xlu0 %656
        %658 = vrot.lane.b32.xlu0 %v488, 123
        %v659 = vpop.permute.xlu0 %658
        %660 = vrot.lane.b32.xlu0 %v495, 123
        %v661 = vpop.permute.xlu0 %660
        %662 = vrot.lane.b32.xlu0 %v502, 123
        %v663 = vpop.permute.xlu0 %662
        %664 = vrot.lane.b32.xlu0 %v509, 123
        %v665 = vpop.permute.xlu0 %664
        %666 = vrot.lane.b32.xlu0 %v516, 123
        %v667 = vpop.permute.xlu0 %666
        %668 = vrot.lane.b32.xlu0 %v523, 123
        %v669 = vpop.permute.xlu0 %668
        %670 = vrot.lane.b32.xlu0 %v530, 123
        %v671 = vpop.permute.xlu0 %670
        %672 = vrot.lane.b32.xlu0 %v537, 123
        %v673 = vpop.permute.xlu0 %672
        %674 = vrot.lane.b32.xlu0 %v544, 123
        %v675 = vpop.permute.xlu0 %674
        %676 = vrot.lane.b32.xlu0 %v551, 123
        %v677 = vpop.permute.xlu0 %676
        %678 = vrot.lane.b32.xlu0 %v558, 123
        %v679 = vpop.permute.xlu0 %678
        %680 = vrot.lane.b32.xlu0 %v565, 123
        %v681 = vpop.permute.xlu0 %680
        %682 = vrot.lane.b32.xlu0 %v572, 123
        %v683 = vpop.permute.xlu0 %682
        %684 = vrot.lane.b32.xlu0 %v579, 123
        %v685 = vpop.permute.xlu0 %684
        %686 = vrot.lane.b32.xlu0 %v586, 123
        %v687 = vpop.permute.xlu0 %686
        %688 = vrot.lane.b32.xlu0 %v593, 123
        %v689 = vpop.permute.xlu0 %688
        %722 = vxpose.xlu0.b32.start [1/16] %v627, 128
        %723 = vxpose.xlu0.b32.cont [2/16] %v629, 128
        %724 = vxpose.xlu0.b32.cont [3/16] %v631, 128
        %725 = vxpose.xlu0.b32.cont [4/16] %v633, 128
        %726 = vxpose.xlu0.b32.cont [5/16] %v635, 128
        %727 = vxpose.xlu0.b32.cont [6/16] %v637, 128
        %728 = vxpose.xlu0.b32.cont [7/16] %v639, 128
        %729 = vxpose.xlu0.b32.cont [8/16] %v641, 128
        %730 = vxpose.xlu0.b32.cont [9/16] %v643, 128
        %731 = vxpose.xlu0.b32.cont [10/16] %v645, 128
        %732 = vxpose.xlu0.b32.cont [11/16] %v647, 128
        %733 = vxpose.xlu0.b32.cont [12/16] %v649, 128
        %734 = vxpose.xlu0.b32.cont [13/16] %v651, 128
        %735 = vxpose.xlu0.b32.cont [14/16] %v653, 128
        %736 = vxpose.xlu0.b32.cont [15/16] %v655, 128
        %737 = vxpose.xlu0.b32.end [16/16] %v657, 128
        %v738 = vpop.trf.xlu0
        %v739 = vpop.trf.xlu0
        %v740 = vpop.trf.xlu0
        %v741 = vpop.trf.xlu0
        %v742 = vpop.trf.xlu0
        %v743 = vpop.trf.xlu0
        %v744 = vpop.trf.xlu0
        %v745 = vpop.trf.xlu0
        %v746 = vpop.trf.xlu0
        %v747 = vpop.trf.xlu0
        %v748 = vpop.trf.xlu0
        %v749 = vpop.trf.xlu0
        %v750 = vpop.trf.xlu0
        %v751 = vpop.trf.xlu0
        %v752 = vpop.trf.xlu0
        %v753 = vpop.trf.xlu0
        %754 = vxpose.xlu0.b32.start [1/16] %v659, 128
        %755 = vxpose.xlu0.b32.cont [2/16] %v661, 128
        %756 = vxpose.xlu0.b32.cont [3/16] %v663, 128
        %757 = vxpose.xlu0.b32.cont [4/16] %v665, 128
        %758 = vxpose.xlu0.b32.cont [5/16] %v667, 128
        %759 = vxpose.xlu0.b32.cont [6/16] %v669, 128
        %760 = vxpose.xlu0.b32.cont [7/16] %v671, 128
        %761 = vxpose.xlu0.b32.cont [8/16] %v673, 128
        %762 = vxpose.xlu0.b32.cont [9/16] %v675, 128
        %763 = vxpose.xlu0.b32.cont [10/16] %v677, 128
        %764 = vxpose.xlu0.b32.cont [11/16] %v679, 128
        %765 = vxpose.xlu0.b32.cont [12/16] %v681, 128
        %766 = vxpose.xlu0.b32.cont [13/16] %v683, 128
        %767 = vxpose.xlu0.b32.cont [14/16] %v685, 128
        %768 = vxpose.xlu0.b32.cont [15/16] %v687, 128
        %769 = vxpose.xlu0.b32.end [16/16] %v689, 128
        %v770 = vpop.trf.xlu0
        %v771 = vpop.trf.xlu0
        %v772 = vpop.trf.xlu0
        %v773 = vpop.trf.xlu0
        %v774 = vpop.trf.xlu0
        %v775 = vpop.trf.xlu0
        %v776 = vpop.trf.xlu0
        %v777 = vpop.trf.xlu0
        %v778 = vpop.trf.xlu0
        %v779 = vpop.trf.xlu0
        %v780 = vpop.trf.xlu0
        %v781 = vpop.trf.xlu0
        %v782 = vpop.trf.xlu0
        %v783 = vpop.trf.xlu0
        %v784 = vpop.trf.xlu0
        %v785 = vpop.trf.xlu0
        %786 = vst [vmem:[%s134] sm:$0xff] %v738
        %787 = vst [vmem:[%s134 + $0x8] sm:$0xff] %v770
        %s788 = sand.u32 %s65, 1
        %s789 = scalar_lea.sflag [#allocation3], %s788
        %s790 = sand.u32 %s65, 1
        %s791 = smul.addr %s790, 16
        %s792 = scalar_lea.vmem [#allocation2], %s791
        // Predicated region
        $region25: #{tpu_custom_call.1} parent=23 // pred_check
          %p793 = pneg %p75
        $region26: #{tpu_custom_call.1} parent=23 // pred_check_branch
          %795 = sbr.rel (%p793) target = $region28
        $region27: #{tpu_custom_call.1} parent=23 // pred_region
          %s796 = smul.u32 2, %s20
          %s798 = ssub.s32 256, 256
          %799 = vsyncadd %s789, %s798
          %s800 = smul.addr %s19, 2
          %s801 = sadd.s32 %s796, %s800
          %s802 = smul.addr %s801, 128
          %s803 = scalar_lea.hbm %s1, %s802
          %s805 = sshll.u32 %s792, 4
          %s806 = int_to_ptr.vmem [resolvable:$true] %s805
          %808 = dma.vmem_to_hbm [thread:$0]  %s806, 256, %s803, %s789
        $region28: #{tpu_custom_call.1} parent=23 // pred_fallthru
          _
      $region24: #{tpu_custom_call.1} parent=5 // pred_fallthru
        _
      %p809 = scmp.le.s32.totalorder 2, %s10
      // Predicated region
      $region29: #{tpu_custom_call.1} parent=5 // pred_check
        %p810 = pneg %p809
      $region30: #{tpu_custom_call.1} parent=5 // pred_check_branch
        %812 = sbr.rel (%p810) target = $region32
      $region31: #{tpu_custom_call.1} parent=5 // pred_region
        %s813 = ssub.s32 %s10, 2
        // Predicated region
        $region33: #{tpu_custom_call.1} parent=31 // pred_check
          %p814 = pneg %p81
        $region34: #{tpu_custom_call.1} parent=31 // pred_check_branch
          %816 = sbr.rel (%p814) target = $region36
        $region35: #{tpu_custom_call.1} parent=31 // pred_region
          %s817 = sand.u32 %s66, 1
          %s818 = scalar_lea.sflag [#allocation3], %s817
          %s819 = sand.u32 %s66, 1
          %s820 = smul.addr %s819, 16
          %s821 = scalar_lea.vmem [#allocation2], %s820
          %822 = dma.done %s818, 256
        $region36: #{tpu_custom_call.1} parent=31 // pred_fallthru
          _
      $region32: #{tpu_custom_call.1} parent=5 // pred_fallthru
        _
    $region6: #{tpu_custom_call.1} parent=1 // loop_footer
      %s14 = sadd.s32 1, %s10
    $region7: #{tpu_custom_call.1} parent=1 // loop_footer_branch
      %9 = sbr.rel target = $region3
    $region8: #{tpu_custom_call.1} parent=1 // loop_exit
      _
    %823 = vsyncpa [#allocation3], 1
    %s824 = scalar_lea.sflag [#allocation3], 1
    %825 = vsyncpa %s824, 1

</llo_original>
